<compile_context>
chip_gen: v7x
topology: tpu7x:2x2x1
jax: 0.10.0
libtpu: 0.0.40
codegen_flags: <defaults>
</compile_context>

<pallas_src>
import functools

import jax
import jax.numpy as jnp
from jax.experimental import pallas as pl
from jax.experimental.pallas import tpu as pltpu

BN_EPS = 1e-5  # nn.BatchNorm2d default


# ---------------------------------------------------------------------------
# Kernels
# ---------------------------------------------------------------------------
def _fused_sse_kernel(x_ref, params_ref, w_ref, out_ref, *, inv_hw):
    """Single-pass SSE for one sample group.

    x_ref      : (R, HW)  rows = samples_in_group * C, spatial on lanes
    params_ref : (R, 3)   columns = [bn_scale, bn_shift, conv_bias]
    w_ref      : (R, R)   block-diagonal 1x1-conv weight (one block per sample)
    out_ref    : (R, HW)
    """
    x = x_ref[...]
    p = params_ref[...]
    scale = p[:, 0:1]
    shift = p[:, 1:2]
    bias = p[:, 2:3]

    # Per-row spatial mean (f32 accumulation), then mean(bn) = scale*mean + shift.
    sums = jnp.sum(x.astype(jnp.float32), axis=1, keepdims=True)      # (R, 1)
    pooled_bn = scale * (sums * inv_hw) + shift                       # (R, 1)

    # Tiny per-sample gate matvec + sigmoid, entirely in-kernel.
    logit = jnp.dot(w_ref[...], pooled_bn,
                    preferred_element_type=jnp.float32) + bias        # (R, 1)
    gate = 1.0 / (1.0 + jnp.exp(-logit))                              # sigmoid

    mul = scale * gate
    add = shift * gate
    if x.dtype == jnp.bfloat16:
        # bf16-capable VPUs: keep the elementwise FMA in bf16 (halves vreg work).
        out_ref[...] = (x * mul.astype(x.dtype) + add.astype(x.dtype)
                        ).astype(out_ref.dtype)
    else:
        out_ref[...] = (x.astype(jnp.float32) * mul + add).astype(out_ref.dtype)


def _row_sum_kernel(x_ref, sum_ref, *, hw, hw_tile, needs_mask):
    # x_ref: (row_tile, hw_tile) with (N*C) rows on sublanes; sum_ref: (row_tile, 1)
    @pl.when(pl.program_id(1) == 0)
    def _():
        sum_ref[...] = jnp.zeros_like(sum_ref)

    x = x_ref[...].astype(jnp.float32)
    if needs_mask:  # ragged last HW tile: zero the out-of-range lanes
        col = (pl.program_id(1) * hw_tile
               + jax.lax.broadcasted_iota(jnp.int32, x.shape, 1))
        x = jnp.where(col < hw, x, 0.0)
    sum_ref[...] += jnp.sum(x, axis=1, keepdims=True)


def _fma_kernel(x_ref, coef_ref, out_ref):
    # out = x * mul + add, per-row coefficients packed as coef[:, 0]=mul, [:,1]=add.
    coef = coef_ref[...]
    mul = coef[:, 0:1]
    add = coef[:, 1:2]
    x = x_ref[...].astype(coef.dtype)
    out_ref[...] = (x * mul + add).astype(out_ref.dtype)


# ---------------------------------------------------------------------------
# Device / tiling helpers
# ---------------------------------------------------------------------------
def _vmem_capacity_bytes():
    try:
        info = pltpu.get_tpu_info()
        cap = int(getattr(info, "vmem_capacity_bytes", 0))
        if cap > 0:
            return cap
    except Exception:
        pass
    return 64 * 1024 * 1024  # conservative default (v7x per-core VMEM)


def _pick_row_tile(rows):
    """Largest multiple-of-8 divisor of `rows` (capped at 64), else full extent."""
    if rows <= 8 or rows % 8 != 0:
        return rows
    best = 8
    t = 8
    cap = min(rows, 64)
    while t <= cap:
        if rows % t == 0:
            best = t
        t += 8
    return best


def _pick_hw_tiling(hw, row_tile, itemsize, budget):
    """Return (hw_tile, n_hw_tiles, needs_mask). Never falls back to a huge block."""
    if hw <= 128:
        return hw, 1, False            # full-extent last dim: always legal
    lanes = min(budget // max(row_tile * itemsize, 1), hw) // 128 * 128
    max_lanes = max(128, lanes)
    # Prefer a multiple-of-128 divisor of hw (mask-free) if it is large enough.
    best = 0
    t = 128
    while t <= max_lanes:
        if hw % t == 0:
            best = t
        t += 128
    if best and (2 * best >= max_lanes or best >= 4096):
        return best, hw // best, False
    # Otherwise use balanced 128-multiple tiles with a masked ragged last tile.
    n_tiles = -(-hw // max_lanes)
    tile = ((-(-hw // n_tiles)) + 127) // 128 * 128
    n_tiles = -(-hw // tile)
    return tile, n_tiles, (hw % tile != 0)


# ---------------------------------------------------------------------------
# Wrapper
# ---------------------------------------------------------------------------
def sse_block(x_nchw, gamma, beta, running_mean, running_var, conv_w, conv_b,
              *, force_two_pass=False):
    """x_nchw: (N, C, H, W).  conv_w: (C_out, C_in) or (C_out, C_in, 1, 1)."""
    N, C, H, W = x_nchw.shape
    conv_w2d = conv_w.reshape((conv_w.shape[0], -1))
    C_out = conv_w2d.shape[0]
    if C_out != C or conv_w2d.shape[1] != C:
        # torch.mul(bn, x) in the original forward only broadcasts correctly
        # when out_channels == in_channels.
        raise ValueError(f"SSEBlock requires out_channels == in_channels "
                         f"(got C_in={C}, C_out={C_out})")
    HW = H * W
    x = x_nchw.reshape(N, C, HW)                    # free reshape, no transpose

    f32 = jnp.float32
    # Fold the eval-mode BN affine once on the host: bn = x*scale + shift.
    scale = gamma.astype(f32) * jax.lax.rsqrt(running_var.astype(f32) + BN_EPS)
    shift = beta.astype(f32) - running_mean.astype(f32) * scale
    w = conv_w2d.astype(f32)
    b = conv_b.astype(f32)

    itemsize = jnp.dtype(x_nchw.dtype).itemsize
    cap = _vmem_capacity_bytes()
    vmem_limit = min((cap * 3) // 4, 100 * 1024 * 1024)

    # ---- Fused single-pass path ---------------------------------------------
    # Group samples so the sublane axis is full when C is small (e.g. C=4 -> 2
    # samples per block).  The gate matvec becomes block-diagonal.
    S = 1
    if C < 8:
        for cand in range(max(1, 8 // C), 0, -1):
            if N % cand == 0:
                S = cand
                break
    R = S * C
    blk_bytes = R * HW * itemsize
    # double-buffered x + out blocks, plus f32 temporaries inside the kernel
    fused_est = 2 * (2 * blk_bytes) + 2 * R * HW * 4
    fused_budget = (cap * 55) // 100

    if (not force_two_pass) and fused_est <= fused_budget:
        xg = x.reshape(N // S, R, HW)
        scale_t = jnp.tile(scale, (S,)).reshape(R, 1)
        shift_t = jnp.tile(shift, (S,)).reshape(R, 1)
        bias_t = jnp.tile(b, (S,)).reshape(R, 1)
        params = jnp.concatenate([scale_t, shift_t, bias_t], axis=1)   # (R, 3)
        w_bd = jnp.kron(jnp.eye(S, dtype=f32), w) if S > 1 else w      # (R, R)

        kernel = functools.partial(_fused_sse_kernel, inv_hw=1.0 / float(HW))
        out = pl.pallas_call(
            kernel,
            out_shape=jax.ShapeDtypeStruct((N // S, R, HW), x_nchw.dtype),
            grid_spec=pltpu.PrefetchScalarGridSpec(
                num_scalar_prefetch=0,
                grid=(N // S,),
                in_specs=[
                    pl.BlockSpec((None, R, HW), lambda n: (n, 0, 0)),   # x group
                    pl.BlockSpec((R, 3), lambda n: (0, 0)),             # params
                    pl.BlockSpec((R, R), lambda n: (0, 0)),             # conv weight
                ],
                out_specs=pl.BlockSpec((None, R, HW), lambda n: (n, 0, 0)),
            ),
            compiler_params=pltpu.CompilerParams(
                dimension_semantics=("parallel",),
                vmem_limit_bytes=vmem_limit),
        )(xg, params, w_bd)
        return out.reshape(N, C, H, W)

    # ---- Two-pass streaming path (large per-sample feature maps) ------------
    rows = N * C
    x_rows = x.reshape(rows, HW)                     # (N*C, HW): rows on sublanes
    row_tile = _pick_row_tile(rows)
    budget = max(cap // 16, 1 << 20)                 # per-block VMEM budget
    hw_tile, n_hw, needs_mask = _pick_hw_tiling(HW, row_tile, itemsize, budget)

    # Pass 1: per-(sample, channel) spatial sums (f32 accumulator).
    sum_kernel = functools.partial(_row_sum_kernel, hw=HW, hw_tile=hw_tile,
                                   needs_mask=needs_mask)
    sums = pl.pallas_call(
        sum_kernel,
        out_shape=jax.ShapeDtypeStruct((rows, 1), jnp.float32),
        grid_spec=pltpu.PrefetchScalarGridSpec(
            num_scalar_prefetch=0,
            grid=(rows // row_tile, n_hw),
            in_specs=[pl.BlockSpec((row_tile, hw_tile), lambda r, t: (r, t))],
            out_specs=pl.BlockSpec((row_tile, 1), lambda r, t: (r, 0)),
        ),
        compiler_params=pltpu.CompilerParams(
            dimension_semantics=("parallel", "arbitrary"),
            vmem_limit_bytes=vmem_limit),
    )(x_rows)

    # Tiny gate math in plain XLA: one batched (N,C) x (C,C_out) dot.
    mean_x = sums.reshape(N, C) / jnp.float32(HW)
    pooled_bn = mean_x * scale[None, :] + shift[None, :]
    gate = jax.nn.sigmoid(pooled_bn @ w.T + b[None, :])               # (N, C)

    # out = bn * gate = x * (scale*gate) + (shift*gate); pack per-row coefficients.
    coef_dtype = jnp.bfloat16 if x_nchw.dtype == jnp.bfloat16 else jnp.float32
    mul = (scale[None, :] * gate).reshape(rows, 1)
    add = (shift[None, :] * gate).reshape(rows, 1)
    coef = jnp.concatenate([mul, add], axis=1).astype(coef_dtype)      # (rows, 2)

    # Pass 2: stream x again, apply the fused affine+gate FMA.
    out = pl.pallas_call(
        _fma_kernel,
        out_shape=jax.ShapeDtypeStruct((rows, HW), x_nchw.dtype),
        grid_spec=pltpu.PrefetchScalarGridSpec(
            num_scalar_prefetch=0,
            grid=(rows // row_tile, n_hw),
            in_specs=[
                pl.BlockSpec((row_tile, hw_tile), lambda r, t: (r, t)),  # x
                pl.BlockSpec((row_tile, 2), lambda r, t: (r, 0)),        # coef
            ],
            out_specs=pl.BlockSpec((row_tile, hw_tile), lambda r, t: (r, t)),
        ),
        compiler_params=pltpu.CompilerParams(
            dimension_semantics=("parallel", "parallel"),
            vmem_limit_bytes=vmem_limit),
    )(x_rows, coef)

    return out.reshape(N, C, H, W)


# ---------------------------------------------------------------------------
# Pure-JAX reference (NCHW) for correctness check
# ---------------------------------------------------------------------------
def sse_block_ref(x, gamma, beta, mean, var, w, b):
    g = gamma[None, :, None, None]
    bt = beta[None, :, None, None]
    m = mean[None, :, None, None]
    v = var[None, :, None, None]
    bn = (x - m) * g / jnp.sqrt(v + BN_EPS) + bt
    pooled = jnp.mean(bn, axis=(2, 3), keepdims=True)                 # (N,C,1,1)
    conv = jnp.einsum('ncij,oc->noij', pooled, w) + b[None, :, None, None]
    gate = jax.nn.sigmoid(conv)
    return bn * gate


if __name__ == "__main__":
    # Small shapes consistent with the module: in_channels == out_channels
    # (required for the bn * x broadcast in the original forward).
    N, C, H, W = 2, 4, 16, 16
    key = jax.random.PRNGKey(0)
    kx, kw, kb = jax.random.split(key, 3)

    x = jax.random.normal(kx, (N, C, H, W), dtype=jnp.float32)

    # Deterministic synthetic parameters (shapes from SSEBlock.__init__).
    gamma = 1.0 + 0.1 * jnp.arange(C, dtype=jnp.float32)
    beta = 0.05 * jnp.arange(C, dtype=jnp.float32)
    running_mean = 0.02 * jnp.arange(C, dtype=jnp.float32)
    running_var = 1.0 + 0.03 * jnp.arange(C, dtype=jnp.float32)
    conv_w = 0.1 * jax.random.normal(kw, (C, C), dtype=jnp.float32)    # (out, in)
    conv_b = 0.01 * jax.random.normal(kb, (C,), dtype=jnp.float32)

    ref = sse_block_ref(x, gamma, beta, running_mean, running_var, conv_w, conv_b)

    # Fused single-pass path (default for shapes that fit VMEM).
    out_fused = jax.block_until_ready(
        sse_block(x, gamma, beta, running_mean, running_var, conv_w, conv_b))
    assert out_fused.shape == (N, C, H, W)
    assert jnp.allclose(out_fused, ref, atol=2e-5, rtol=2e-5), "fused path mismatch"

    # Two-pass streaming fallback (used for large feature maps) — validate too.
    out_stream = jax.block_until_ready(
        sse_block(x, gamma, beta, running_mean, running_var, conv_w, conv_b,
                  force_two_pass=True))
    assert out_stream.shape == (N, C, H, W)
    assert jnp.allclose(out_stream, ref, atol=2e-5, rtol=2e-5), "two-pass mismatch"

    print("KERNEL_OK")
</pallas_src>

<mosaic_0001>
module attributes {stable_mosaic.version = 11 : i64} {
  func.func @_fused_sse_kernel(%arg0: i32, %arg1: memref<1x8x256xf32, #tpu.memory_space<vmem>>, %arg2: memref<8x3xf32, #tpu.memory_space<vmem>>, %arg3: memref<8x8xf32, #tpu.memory_space<vmem>>, %arg4: memref<1x8x256xf32, #tpu.memory_space<vmem>>) attributes {dimension_semantics = [#tpu.dimension_semantics<parallel>], iteration_bounds = array<i64: 1>, scalar_prefetch = 0 : i64, scratch_operands = 0 : i64, tpu.core_type = #tpu.core_type<tc>, window_params = [{transform_indices = @transform_0, window_bounds = array<i64: 1, 8, 256>}, {pipeline_mode = #tpu.pipeline_mode<synchronous>, transform_indices = @transform_1, window_bounds = array<i64: 8, 3>}, {pipeline_mode = #tpu.pipeline_mode<synchronous>, transform_indices = @transform_2, window_bounds = array<i64: 8, 8>}, {transform_indices = @transform_3, window_bounds = array<i64: 1, 8, 256>}]} {
    %c0 = arith.constant 0 : index
    %c0_0 = arith.constant 0 : index
    %c0_1 = arith.constant 0 : index
    %0 = vector.load %arg1[%c0, %c0_0, %c0_1] : memref<1x8x256xf32, #tpu.memory_space<vmem>>, vector<1x8x256xf32>
    %1 = vector.shape_cast %0 : vector<1x8x256xf32> to vector<8x256xf32>
    %c0_2 = arith.constant 0 : index
    %c0_3 = arith.constant 0 : index
    %2 = vector.load %arg2[%c0_2, %c0_3] : memref<8x3xf32, #tpu.memory_space<vmem>>, vector<8x3xf32>
    %3 = vector.extract_strided_slice %2 {offsets = [0, 0], sizes = [8, 1], strides = [1, 1]} : vector<8x3xf32> to vector<8x1xf32>
    %4 = vector.extract_strided_slice %2 {offsets = [0, 1], sizes = [8, 1], strides = [1, 1]} : vector<8x3xf32> to vector<8x1xf32>
    %5 = vector.extract_strided_slice %2 {offsets = [0, 2], sizes = [8, 1], strides = [1, 1]} : vector<8x3xf32> to vector<8x1xf32>
    %cst = arith.constant dense<0.000000e+00> : vector<8xf32>
    %6 = vector.multi_reduction <add>, %1, %cst [1] : vector<8x256xf32> to vector<8xf32>
    %7 = vector.shape_cast %6 : vector<8xf32> to vector<8x1xf32>
    %cst_4 = arith.constant 3.906250e-03 : f32
    %8 = vector.broadcast %cst_4 : f32 to vector<8x1xf32>
    %9 = arith.mulf %7, %8 : vector<8x1xf32>
    %10 = arith.mulf %3, %9 : vector<8x1xf32>
    %11 = arith.addf %10, %4 : vector<8x1xf32>
    %c0_5 = arith.constant 0 : index
    %c0_6 = arith.constant 0 : index
    %12 = vector.load %arg3[%c0_5, %c0_6] : memref<8x8xf32, #tpu.memory_space<vmem>>, vector<8x8xf32>
    %cst_7 = arith.constant dense<0.000000e+00> : vector<8x1xf32>
    %13 = tpu.matmul %12, %11, %cst_7 {dimension_numbers = #tpu.dot_dimension_numbers<[1], [0], [0], [1], [0, 0, 1, 1], [], []>} : vector<8x8xf32>, vector<8x1xf32>, vector<8x1xf32> -> vector<8x1xf32>
    %14 = arith.addf %13, %5 : vector<8x1xf32>
    %cst_8 = arith.constant 0.000000e+00 : f32
    %15 = vector.broadcast %cst_8 : f32 to vector<8x1xf32>
    %16 = arith.subf %15, %14 : vector<8x1xf32>
    %17 = math.exp %16 : vector<8x1xf32>
    %cst_9 = arith.constant 1.000000e+00 : f32
    %18 = vector.broadcast %cst_9 : f32 to vector<8x1xf32>
    %19 = arith.addf %18, %17 : vector<8x1xf32>
    %cst_10 = arith.constant 1.000000e+00 : f32
    %20 = vector.broadcast %cst_10 : f32 to vector<8x1xf32>
    %21 = arith.divf %20, %19 : vector<8x1xf32>
    %22 = arith.mulf %3, %21 : vector<8x1xf32>
    %23 = arith.mulf %4, %21 : vector<8x1xf32>
    %24 = vector.broadcast %22 : vector<8x1xf32> to vector<8x256xf32>
    %25 = arith.mulf %1, %24 : vector<8x256xf32>
    %26 = vector.broadcast %23 : vector<8x1xf32> to vector<8x256xf32>
    %27 = arith.addf %25, %26 : vector<8x256xf32>
    %c0_11 = arith.constant 0 : index
    %c0_12 = arith.constant 0 : index
    %c0_13 = arith.constant 0 : index
    %28 = vector.load %arg4[%c0_11, %c0_12, %c0_13] : memref<1x8x256xf32, #tpu.memory_space<vmem>>, vector<1x8x256xf32>
    %29 = vector.shape_cast %28 : vector<1x8x256xf32> to vector<8x256xf32>
    %30 = vector.shape_cast %27 : vector<8x256xf32> to vector<1x8x256xf32>
    tpu.vector_store %arg4[%c0_11, %c0_12, %c0_13], %30 {strides = array<i32>} : memref<1x8x256xf32, #tpu.memory_space<vmem>>, vector<1x8x256xf32>,
    return
  }
  func.func @transform_0(%arg0: i32) -> (i32, i32, i32) {
    %c0_i32 = arith.constant 0 : i32
    %c0_i32_0 = arith.constant 0 : i32
    %c0_i32_1 = arith.constant 0 : i32
    return %arg0, %c0_i32, %c0_i32_0 : i32, i32, i32
  }
  func.func @transform_1(%arg0: i32) -> (i32, i32) {
    %c0_i32 = arith.constant 0 : i32
    %c0_i32_0 = arith.constant 0 : i32
    %c0_i32_1 = arith.constant 0 : i32
    return %c0_i32, %c0_i32_0 : i32, i32
  }
  func.func @transform_2(%arg0: i32) -> (i32, i32) {
    %c0_i32 = arith.constant 0 : i32
    %c0_i32_0 = arith.constant 0 : i32
    %c0_i32_1 = arith.constant 0 : i32
    return %c0_i32, %c0_i32_0 : i32, i32
  }
  func.func @transform_3(%arg0: i32) -> (i32, i32, i32) {
    %c0_i32 = arith.constant 0 : i32
    %c0_i32_0 = arith.constant 0 : i32
    %c0_i32_1 = arith.constant 0 : i32
    return %arg0, %c0_i32, %c0_i32_0 : i32, i32, i32
  }
}

</mosaic_0001>

<llo_original>
// kernel: tpu_custom_call.1
$region0: #{tpu_custom_call.1}
  #allocation0 [shape = 'u32[]', space=smem, size = 0x4, offset = 0x4, fixed_abs, tag = 'smem constant byte address 0x4 - core index']
  #allocation1 [shape = 'u32[144,128]{1,0:T(1,128)}', space=vmem, size = 0x12000, scoped, tag = 'internal scratch']
  %s0 = inlined_call_operand.hbm [shape: f32[1,8,256], index: 0, kind: input, shape index: {}]
  %s1 = inlined_call_operand.vmem [shape: f32[8,3], index: 1, kind: input, shape index: {}]
  %s2 = inlined_call_operand.vmem [shape: f32[8,8], index: 2, kind: input, shape index: {}]
  %s3 = inlined_call_operand.hbm [shape: f32[1,8,256], index: 3, kind: output, shape index: {}]
  %s4 = sld [smem:[#allocation0]]
  $region26: #{tpu_custom_call.1} parent=0
    _
  %s6 = ssub.s32 1, %s4
  %s7 = scalar_select 0, %s6, %s4
  $region1: #{tpu_custom_call.1} parent=0
    #allocation2 [shape = 'u8[8192]{0}', space=vmem, size = 0x2000, scoped, tag = 'input window, operand 0, single buffered']
    #allocation3 [shape = 's32[1]{0}', space=sflag, size = 0x4, scoped, tag = 'scoped memory for tpu_custom_call.1']
    #allocation4 [shape = 's32[1]{0}', space=sflag, size = 0x4, scoped, tag = 'scoped memory for tpu_custom_call.1']
    #allocation5 [shape = 'u8[8192]{0}', space=vmem, size = 0x2000, scoped, tag = 'output window, operand 0, single buffered']
    %8 = vsyncpa [#allocation3], 0
    %9 = vsyncpa [#allocation4], 0
    // Predicated region
    $region2: #{tpu_custom_call.1} parent=1 // pred_check
      _
    $region3: #{tpu_custom_call.1} parent=1 // pred_check_branch
      %11 = sbr.rel (0) target = $region5
    $region4: #{tpu_custom_call.1} parent=1 // pred_region
      %s13 = ssub.s32 256, 256
      %14 = vsyncadd [#allocation3], %s13
      %s16 = sshll.u32 [#allocation2], 4
      %s17 = int_to_ptr.vmem [resolvable:$true] %s16
      %19 = dma.hbm_to_vmem [thread:$0]  %s0, 256, %s17, [#allocation3]
    $region5: #{tpu_custom_call.1} parent=1 // pred_fallthru
      _
    // Predicated region
    $region6: #{tpu_custom_call.1} parent=1 // pred_check
      _
    $region7: #{tpu_custom_call.1} parent=1 // pred_check_branch
      %21 = sbr.rel (0) target = $region9
    $region8: #{tpu_custom_call.1} parent=1 // pred_region
      _
    $region9: #{tpu_custom_call.1} parent=1 // pred_fallthru
      _
    // Predicated region
    $region10: #{tpu_custom_call.1} parent=1 // pred_check
      _
    $region11: #{tpu_custom_call.1} parent=1 // pred_check_branch
      %23 = sbr.rel (0) target = $region13
    $region12: #{tpu_custom_call.1} parent=1 // pred_region
      _
    $region13: #{tpu_custom_call.1} parent=1 // pred_fallthru
      _
    // Predicated region
    $region14: #{tpu_custom_call.1} parent=1 // pred_check
      _
    $region15: #{tpu_custom_call.1} parent=1 // pred_check_branch
      %25 = sbr.rel (0) target = $region17
    $region16: #{tpu_custom_call.1} parent=1 // pred_region
      %26 = dma.done [#allocation3], 256
    $region17: #{tpu_custom_call.1} parent=1 // pred_fallthru
      _
    %v27 = vld [vmem:[#allocation2] sm:$0xff]
    %v28 = vld [vmem:[#allocation2 + $0x8] sm:$0xff]
    %v29 = vld [vmem:[%s1] sm:$0xff]
    %v30 = vadd.f32 %v27, %v28
    %31 = vadd.xlane.f32.xlu0 %v30
    %v32 = vpop.xlane.xlu0 %31
    %v33 = vmul.f32 %v32, 0.00390625
    %v34 = vmul.f32 %v29, %v33
    %36 = vrot.lane.b32.xlu0 %v29, 127
    %v37 = vpop.permute.xlu0 %36
    %v39 = vadd.f32 %v34, %v37
    %v40 = vld [vmem:[%s2] sm:$0xff]
    %41 = vrot.lane.b32.xlu0 %v29, 126
    %v42 = vpop.permute.xlu0 %41
    %vm44 = vcmask 64512
    %v46 = vsel %vm44, %v40, 0
    %48 = vmatprep.subr.mxu0 0.0
    %49 = vmatpush1.msra.mxu0 %v39
    %50 = vmatprep.subr.mxu0 0.0
    %51 = vmatpush1.msra.mxu0 0.0
    %52 = vmatprep.subr.mxu0 0.0
    %53 = vmatpush1.msra.mxu0 0.0
    %54 = vmatprep.subr.mxu0 0.0
    %55 = vmatpush1.msra.mxu0 0.0
    %56 = vmatprep.subr.mxu0 0.0
    %57 = vmatpush1.msra.mxu0 0.0
    %58 = vmatprep.subr.mxu0 0.0
    %59 = vmatpush1.msra.mxu0 0.0
    %60 = vmatprep.subr.mxu0 0.0
    %61 = vmatpush1.msra.mxu0 0.0
    %62 = vmatprep.subr.mxu0 0.0
    %63 = vmatpush1.msra.mxu0 0.0
    %64 = vmatprep.subr.mxu0 0.0
    %65 = vmatpush1.msra.mxu0 0.0
    %66 = vmatprep.subr.mxu0 0.0
    %67 = vmatpush1.msra.mxu0 0.0
    %68 = vmatprep.subr.mxu0 0.0
    %69 = vmatpush1.msra.mxu0 0.0
    %70 = vmatprep.subr.mxu0 0.0
    %71 = vmatpush1.msra.mxu0 0.0
    %72 = vmatprep.subr.mxu0 0.0
    %73 = vmatpush1.msra.mxu0 0.0
    %74 = vmatprep.subr.mxu0 0.0
    %75 = vmatpush1.msra.mxu0 0.0
    %76 = vmatprep.subr.mxu0 0.0
    %77 = vmatpush1.msra.mxu0 0.0
    %78 = vmatprep.subr.mxu0 0.0
    %79 = vmatpush1.msra.mxu0 0.0
    %80 = vmatprep.subr.mxu0 0.0
    %81 = vmatpush1.msra.mxu0 0.0
    %82 = vmatprep.subr.mxu0 0.0
    %83 = vmatpush1.msra.mxu0 0.0
    %84 = vmatprep.subr.mxu0 0.0
    %85 = vmatpush1.msra.mxu0 0.0
    %86 = vmatprep.subr.mxu0 0.0
    %87 = vmatpush1.msra.mxu0 0.0
    %88 = vmatprep.subr.mxu0 0.0
    %89 = vmatpush1.msra.mxu0 0.0
    %90 = vmatprep.subr.mxu0 0.0
    %91 = vmatpush1.msra.mxu0 0.0
    %92 = vmatprep.subr.mxu0 0.0
    %93 = vmatpush1.msra.mxu0 0.0
    %94 = vmatprep.subr.mxu0 0.0
    %95 = vmatpush1.msra.mxu0 0.0
    %96 = vmatprep.subr.mxu0 0.0
    %97 = vmatpush1.msra.mxu0 0.0
    %98 = vmatprep.subr.mxu0 0.0
    %99 = vmatpush1.msra.mxu0 0.0
    %100 = vmatprep.subr.mxu0 0.0
    %101 = vmatpush1.msra.mxu0 0.0
    %102 = vmatprep.subr.mxu0 0.0
    %103 = vmatpush1.msra.mxu0 0.0
    %104 = vmatprep.subr.mxu0 0.0
    %105 = vmatpush1.msra.mxu0 0.0
    %106 = vmatprep.subr.mxu0 0.0
    %107 = vmatpush1.msra.mxu0 0.0
    %108 = vmatprep.subr.mxu0 0.0
    %109 = vmatpush1.msra.mxu0 0.0
    %110 = vmatprep.subr.mxu0 0.0
    %111 = vmatpush1.msra.mxu0 0.0
    %112 = vmatprep.mubr.f32.mxu0 0.0
    %113 = vmatmul.mubr.f32.gmra.mrb[0].mxu0 %v46
    %v114 = vpop.f32.mrb[0].mxu0
    %v115 = vadd.f32 %v42, %v114
    %v116 = vpop.f32.mrb[0].mxu0
    %117 = vdwg.mxu0
    %v118 = vsub.f32 0.0, %v115
    %v119 = vmul.f32 %v118, 1.442695
    %v120 = vpow.pop %v119
    %v121 = vadd.f32 %v120, 1.0
    %v122 = vrcp.pop %v121
    %v123 = vmul.f32 1.0, %v122
    %v124 = vmul.f32 %v29, %v123
    %126 = vrot.lane.b32.xlu0 %v123, 1
    %v127 = vpop.permute.xlu0 %126
    %v129 = vmul.f32 %v29, %v127
    %131 = vset.pattern.permute.xlu0 0
    %132 = vperm.xlu0 %131, %v124
    %v133 = vpop.permute.xlu0 %132
    %v135 = vmul.f32 %v27, %v133
    %v136 = vmul.f32 %v28, %v133
    %138 = vset.pattern.permute.xlu0 1
    %139 = vperm.xlu0 %138, %v129
    %v140 = vpop.permute.xlu0 %139
    %v142 = vadd.f32 %v135, %v140
    %v143 = vadd.f32 %v136, %v140
    %144 = vst [vmem:[#allocation5] sm:$0xff] %v142
    %145 = vst [vmem:[#allocation5 + $0x8] sm:$0xff] %v143
    // Predicated region
    $region18: #{tpu_custom_call.1} parent=1 // pred_check
      _
    $region19: #{tpu_custom_call.1} parent=1 // pred_check_branch
      %147 = sbr.rel (0) target = $region21
    $region20: #{tpu_custom_call.1} parent=1 // pred_region
      %s149 = ssub.s32 256, 256
      %150 = vsyncadd [#allocation4], %s149
      %s152 = sshll.u32 [#allocation5], 4
      %s153 = int_to_ptr.vmem [resolvable:$true] %s152
      %155 = dma.vmem_to_hbm [thread:$0]  %s153, 256, %s3, [#allocation4]
    $region21: #{tpu_custom_call.1} parent=1 // pred_fallthru
      _
    // Predicated region
    $region22: #{tpu_custom_call.1} parent=1 // pred_check
      _
    $region23: #{tpu_custom_call.1} parent=1 // pred_check_branch
      %157 = sbr.rel (0) target = $region25
    $region24: #{tpu_custom_call.1} parent=1 // pred_region
      %158 = dma.done [#allocation4], 256
    $region25: #{tpu_custom_call.1} parent=1 // pred_fallthru
      _
    %159 = vsyncpa [#allocation3], 1
    %160 = vsyncpa [#allocation4], 1

</llo_original>
